<compile_context>
chip_gen: v7x
topology: tpu7x:2x2x1
jax: 0.10.0
libtpu: 0.0.40
codegen_flags: <defaults>
</compile_context>

<pallas_src>
import jax
import jax.numpy as jnp
from jax import lax
from jax.experimental import pallas as pl
from jax.experimental.pallas import tpu as pltpu


def _metal_step_loss_kernel(x_ref, w1_ref, b1_ref, w2_ref, b2_ref, o_ref, acc_ref):
    j = pl.program_id(1)

    @pl.when(j == 0)
    def _init():
        acc_ref[...] = jnp.zeros_like(acc_ref)

    # linear1 chunk: x (tb, D) contracted with the W1 row-chunk (tn, D) on the
    # lane axes -> h (tb, tn) in f32 on the MXU (A.B^T form; W1 stays in its
    # natural PyTorch (out, in) layout, no relayout per step).
    h = lax.dot_general(
        x_ref[...], w1_ref[...],
        dimension_numbers=(((1,), (1,)), ((), ())),
        preferred_element_type=jnp.float32)
    h = jnp.maximum(h + b1_ref[...], 0.0)          # bias + F.relu_ (f32)

    # linear2 partial sum for this out-feature chunk, emitted lane-dense:
    # (1, tn) . (tb, tn)^T -> (1, tb), accumulated into the f32 scratch.
    acc_ref[...] += lax.dot_general(
        w2_ref[...], h,
        dimension_numbers=(((1,), (1,)), ((), ())),
        preferred_element_type=jnp.float32)

    @pl.when(j == pl.num_programs(1) - 1)
    def _finalize():
        o_ref[...] = (acc_ref[...] + b2_ref[0]).astype(o_ref.dtype)


def _round_up(n, m):
    return ((n + m - 1) // m) * m


def _cdiv(a, b):
    return -(-a // b)


def meta_step_loss_network(x, w1, b1, w2, b2, *, block_b=1024, block_n=None,
                           matmul_dtype=None, core_parallel=False):
    """Pallas forward pass of MetaStepLossNetwork.

    x:  (B, D) float32
    w1: (D, D) float32   (PyTorch layout: out_features x in_features)
    b1: (D,)   float32
    w2: (1, D) float32
    b2: (1,)   float32
    returns (B, 1) float32

    matmul_dtype: optional (e.g. jnp.bfloat16) dtype for the x/W1 MXU inputs;
                  bias/ReLU/linear2 math stays in f32.
    core_parallel: shard the batch-tile axis across TensorCores (v7x).
    """
    B, D = x.shape
    assert w1.shape == (D, D) and b1.shape == (D,)
    assert w2.shape == (1, D) and b2.shape == (1,)

    # ---- batch tiling: lane-dense output blocks ----
    if B <= block_b:
        tb = _round_up(B, 8)                # single (possibly ragged) tile
        num_b = 1
    else:
        tb = _round_up(block_b, 128)        # multi-tile: lane-dense 128-multiple
        num_b = _cdiv(B, tb)
    b_pad = num_b * tb

    # ---- optional bf16 MXU inputs ----
    if matmul_dtype is not None:
        x_mm = x.astype(matmul_dtype)
        w1_mm = w1.astype(matmul_dtype)
    else:
        x_mm, w1_mm = x, w1
    x_itemsize = jnp.dtype(x_mm.dtype).itemsize
    w_itemsize = jnp.dtype(w1_mm.dtype).itemsize

    # ---- N (linear1 out-feature) chunking: stream W1 when it is too big ----
    if block_n is not None and D % block_n == 0 and (block_n == D or block_n % 128 == 0):
        tn = block_n
    else:
        tn = D
        max_chunk = 4 << 20                 # per-buffer W1 chunk target
        if D * D * w_itemsize > 2 * max_chunk:
            for cand in (2048, 1024, 512, 256, 128):
                if D % cand == 0 and cand * D * w_itemsize <= max_chunk:
                    tn = cand
                    break
            # TODO(synk): masked/ragged N-split for D not a multiple of 128.
    num_n = D // tn

    b1_2d = b1.reshape(1, D).astype(jnp.float32)
    w2_f32 = w2.astype(jnp.float32)
    b2_f32 = b2.astype(jnp.float32)

    # Single-buffer operands whose block never changes across the grid.
    res_kw_w = {"pipeline_mode": pl.Buffered(1)} if num_n == 1 else {}
    res_kw_x = {"pipeline_mode": pl.Buffered(1)} if num_b == 1 else {}

    # ---- VMEM budget (double-buffered tiles + accumulator + h intermediate) ----
    needed = (2 * tb * D * x_itemsize        # x tile
              + 2 * tn * D * w_itemsize      # W1 chunk
              + 2 * 2 * tn * 4               # b1 / w2 chunks
              + 2 * tb * 4 + tb * 4          # out block + accumulator
              + 2 * tb * tn * 4)             # h intermediate + headroom
    vmem_limit = int(min(max(needed + (4 << 20), 32 << 20), 120 << 20))

    flops = 2 * b_pad * D * D + 2 * b_pad * D
    bytes_accessed = (b_pad * D * x_itemsize + num_b * D * D * w_itemsize
                      + 2 * D * 4 + b_pad * 4)
    cost = pl.CostEstimate(flops=flops, transcendentals=0,
                           bytes_accessed=bytes_accessed)

    if core_parallel:
        dims = (pltpu.CORE_PARALLEL, pltpu.ARBITRARY)   # v7x: shard batch tiles
    else:
        dims = ("parallel", "arbitrary")

    out = pl.pallas_call(
        _metal_step_loss_kernel,
        out_shape=jax.ShapeDtypeStruct((1, b_pad), jnp.float32),
        grid_spec=pltpu.PrefetchScalarGridSpec(
            num_scalar_prefetch=0,
            grid=(num_b, num_n),
            in_specs=[
                pl.BlockSpec((tb, D), lambda i, j: (i, 0), **res_kw_x),  # x tile
                pl.BlockSpec((tn, D), lambda i, j: (j, 0), **res_kw_w),  # W1 chunk
                pl.BlockSpec((1, tn), lambda i, j: (0, j), **res_kw_w),  # b1 chunk
                pl.BlockSpec((1, tn), lambda i, j: (0, j), **res_kw_w),  # w2 chunk
                pl.BlockSpec(memory_space=pltpu.MemorySpace.SMEM),       # b2 scalar
            ],
            out_specs=pl.BlockSpec((1, tb), lambda i, j: (0, i)),        # lane-dense
            scratch_shapes=[pltpu.VMEM((1, tb), jnp.float32)],
        ),
        compiler_params=pltpu.CompilerParams(
            dimension_semantics=dims,
            vmem_limit_bytes=vmem_limit),
        cost_estimate=cost,
    )(x_mm, w1_mm, b1_2d, w2_f32, b2_f32)

    return out[0, :B][:, None]


def _xavier_uniform(key, out_features, in_features):
    # Matches nn.init.xavier_uniform_ (gain=1) for a (out, in) weight matrix.
    bound = (6.0 / (in_features + out_features)) ** 0.5
    return jax.random.uniform(
        key, (out_features, in_features), dtype=jnp.float32,
        minval=-bound, maxval=bound)


def _reference(x, w1, b1, w2, b2):
    h = jnp.maximum(x @ w1.T + b1, 0.0)
    return h @ w2.T + b2


if __name__ == "__main__":
    def make_params(key, D):
        k_w1, k_w2, k_b1 = jax.random.split(key, 3)
        w1 = _xavier_uniform(k_w1, D, D)
        b1 = 0.1 * jax.random.normal(k_b1, (D,), dtype=jnp.float32)
        w2 = _xavier_uniform(k_w2, 1, D)
        b2 = jnp.array([0.3], dtype=jnp.float32)
        return w1, b1, w2, b2

    key = jax.random.PRNGKey(0)
    k1, k2, k3 = jax.random.split(key, 3)

    # Case 1: single batch tile, single N chunk (common small-D regime), f32.
    B, D = 32, 128
    x = jax.random.normal(k1, (B, D), dtype=jnp.float32)
    w1, b1, w2, b2 = make_params(k2, D)
    out = jax.block_until_ready(meta_step_loss_network(x, w1, b1, w2, b2))
    ref = _reference(x, w1, b1, w2, b2)
    assert out.shape == (B, 1), out.shape
    assert jnp.allclose(out, ref, atol=1e-4, rtol=1e-4), "case1 mismatch"

    # Case 2: multiple lane-dense batch tiles + ragged tail (no wrapper pad).
    B2 = 200
    x2 = jax.random.normal(k3, (B2, D), dtype=jnp.float32)
    out2 = jax.block_until_ready(
        meta_step_loss_network(x2, w1, b1, w2, b2, block_b=128))
    ref2 = _reference(x2, w1, b1, w2, b2)
    assert out2.shape == (B2, 1), out2.shape
    assert jnp.allclose(out2, ref2, atol=1e-4, rtol=1e-4), "case2 mismatch"

    # Case 3: streamed-W1 (N-split) accumulator path, forced at small D.
    D3 = 256
    x3 = jax.random.normal(k1, (16, D3), dtype=jnp.float32)
    w13, b13, w23, b23 = make_params(k2, D3)
    out3 = jax.block_until_ready(
        meta_step_loss_network(x3, w13, b13, w23, b23, block_n=128))
    ref3 = _reference(x3, w13, b13, w23, b23)
    assert jnp.allclose(out3, ref3, atol=1e-4, rtol=1e-4), "case3 mismatch"

    # Case 4: bf16 MXU inputs (looser tolerance).
    out4 = jax.block_until_ready(
        meta_step_loss_network(x, w1, b1, w2, b2, matmul_dtype=jnp.bfloat16))
    assert jnp.allclose(out4, ref, atol=5e-2, rtol=5e-2), "case4 (bf16) mismatch"

    print("KERNEL_OK")
</pallas_src>

<mosaic_0001>
module attributes {stable_mosaic.version = 11 : i64} {
  func.func @_metal_step_loss_kernel(%arg0: i32, %arg1: i32, %arg2: memref<32x128xf32, #tpu.memory_space<vmem>>, %arg3: memref<128x128xf32, #tpu.memory_space<vmem>>, %arg4: memref<1x128xf32, #tpu.memory_space<vmem>>, %arg5: memref<1x128xf32, #tpu.memory_space<vmem>>, %arg6: memref<1xf32, #tpu.memory_space<smem>>, %arg7: memref<1x32xf32, #tpu.memory_space<vmem>>, %arg8: memref<1x32xf32, #tpu.memory_space<vmem>>) attributes {dimension_semantics = [#tpu.dimension_semantics<parallel>, #tpu.dimension_semantics<arbitrary>], iteration_bounds = array<i64: 1, 1>, scalar_prefetch = 0 : i64, scratch_operands = 1 : i64, tpu.core_type = #tpu.core_type<tc>, window_params = [{pipeline_mode = #tpu.pipeline_mode<synchronous>, transform_indices = @transform_0, window_bounds = array<i64: 32, 128>}, {pipeline_mode = #tpu.pipeline_mode<synchronous>, transform_indices = @transform_1, window_bounds = array<i64: 128, 128>}, {pipeline_mode = #tpu.pipeline_mode<synchronous>, transform_indices = @transform_2, window_bounds = array<i64: 1, 128>}, {pipeline_mode = #tpu.pipeline_mode<synchronous>, transform_indices = @transform_3, window_bounds = array<i64: 1, 128>}, {transform_indices = @transform_4, window_bounds = array<i64: 1>}, {transform_indices = @transform_5, window_bounds = array<i64: 1, 32>}]} {
    %c0_i32 = arith.constant 0 : i32
    %0 = arith.cmpi eq, %arg1, %c0_i32 : i32
    %1 = arith.extui %0 : i1 to i32
    %c0_i32_0 = arith.constant 0 : i32
    %2 = arith.cmpi ne, %1, %c0_i32_0 : i32
    scf.if %2 {
      %cst_16 = arith.constant 0.000000e+00 : f32
      %19 = vector.broadcast %cst_16 : f32 to vector<1x32xf32>
      %c0_17 = arith.constant 0 : index
      %c0_18 = arith.constant 0 : index
      %20 = vector.load %arg8[%c0_17, %c0_18] : memref<1x32xf32, #tpu.memory_space<vmem>>, vector<1x32xf32>
      tpu.vector_store %arg8[%c0_17, %c0_18], %19 {strides = array<i32>} : memref<1x32xf32, #tpu.memory_space<vmem>>, vector<1x32xf32>,
    } else {
    }
    %c0 = arith.constant 0 : index
    %c0_1 = arith.constant 0 : index
    %3 = vector.load %arg2[%c0, %c0_1] : memref<32x128xf32, #tpu.memory_space<vmem>>, vector<32x128xf32>
    %c0_2 = arith.constant 0 : index
    %c0_3 = arith.constant 0 : index
    %4 = vector.load %arg3[%c0_2, %c0_3] : memref<128x128xf32, #tpu.memory_space<vmem>>, vector<128x128xf32>
    %cst = arith.constant dense<0.000000e+00> : vector<32x128xf32>
    %5 = tpu.matmul %3, %4, %cst {dimension_numbers = #tpu.dot_dimension_numbers<[1], [1], [0], [0], [0, 0, 1, 0], [], []>} : vector<32x128xf32>, vector<128x128xf32>, vector<32x128xf32> -> vector<32x128xf32>
    %c0_4 = arith.constant 0 : index
    %c0_5 = arith.constant 0 : index
    %6 = vector.load %arg4[%c0_4, %c0_5] : memref<1x128xf32, #tpu.memory_space<vmem>>, vector<1x128xf32>
    %7 = vector.broadcast %6 : vector<1x128xf32> to vector<32x128xf32>
    %8 = arith.addf %5, %7 : vector<32x128xf32>
    %cst_6 = arith.constant 0.000000e+00 : f32
    %9 = vector.broadcast %cst_6 : f32 to vector<32x128xf32>
    %10 = arith.maximumf %8, %9 : vector<32x128xf32>
    %c0_7 = arith.constant 0 : index
    %c0_8 = arith.constant 0 : index
    %11 = vector.load %arg8[%c0_7, %c0_8] : memref<1x32xf32, #tpu.memory_space<vmem>>, vector<1x32xf32>
    %c0_9 = arith.constant 0 : index
    %c0_10 = arith.constant 0 : index
    %12 = vector.load %arg5[%c0_9, %c0_10] : memref<1x128xf32, #tpu.memory_space<vmem>>, vector<1x128xf32>
    %cst_11 = arith.constant dense<0.000000e+00> : vector<1x32xf32>
    %13 = tpu.matmul %12, %10, %cst_11 {dimension_numbers = #tpu.dot_dimension_numbers<[1], [1], [0], [0], [0, 0, 1, 0], [], []>} : vector<1x128xf32>, vector<32x128xf32>, vector<1x32xf32> -> vector<1x32xf32>
    %14 = arith.addf %11, %13 : vector<1x32xf32>
    %c0_12 = arith.constant 0 : index
    %c0_13 = arith.constant 0 : index
    %15 = vector.load %arg8[%c0_12, %c0_13] : memref<1x32xf32, #tpu.memory_space<vmem>>, vector<1x32xf32>
    tpu.vector_store %arg8[%c0_12, %c0_13], %14 {strides = array<i32>} : memref<1x32xf32, #tpu.memory_space<vmem>>, vector<1x32xf32>,
    %c0_i32_14 = arith.constant 0 : i32
    %16 = arith.cmpi eq, %arg1, %c0_i32_14 : i32
    %17 = arith.extui %16 : i1 to i32
    %c0_i32_15 = arith.constant 0 : i32
    %18 = arith.cmpi ne, %17, %c0_i32_15 : i32
    scf.if %18 {
      %c0_16 = arith.constant 0 : index
      %c0_17 = arith.constant 0 : index
      %19 = vector.load %arg8[%c0_16, %c0_17] : memref<1x32xf32, #tpu.memory_space<vmem>>, vector<1x32xf32>
      %c0_18 = arith.constant 0 : index
      %20 = memref.load %arg6[%c0_18] : memref<1xf32, #tpu.memory_space<smem>>
      %21 = vector.broadcast %20 : f32 to vector<1x32xf32>
      %22 = arith.addf %19, %21 : vector<1x32xf32>
      %c0_19 = arith.constant 0 : index
      %c0_20 = arith.constant 0 : index
      %23 = vector.load %arg7[%c0_19, %c0_20] : memref<1x32xf32, #tpu.memory_space<vmem>>, vector<1x32xf32>
      tpu.vector_store %arg7[%c0_19, %c0_20], %22 {strides = array<i32>} : memref<1x32xf32, #tpu.memory_space<vmem>>, vector<1x32xf32>,
    } else {
    }
    return
  }
  func.func @transform_0(%arg0: i32, %arg1: i32) -> (i32, i32) {
    %c0_i32 = arith.constant 0 : i32
    %c0_i32_0 = arith.constant 0 : i32
    return %arg0, %c0_i32 : i32, i32
  }
  func.func @transform_1(%arg0: i32, %arg1: i32) -> (i32, i32) {
    %c0_i32 = arith.constant 0 : i32
    %c0_i32_0 = arith.constant 0 : i32
    return %arg1, %c0_i32 : i32, i32
  }
  func.func @transform_2(%arg0: i32, %arg1: i32) -> (i32, i32) {
    %c0_i32 = arith.constant 0 : i32
    %c0_i32_0 = arith.constant 0 : i32
    return %c0_i32, %arg1 : i32, i32
  }
  func.func @transform_3(%arg0: i32, %arg1: i32) -> (i32, i32) {
    %c0_i32 = arith.constant 0 : i32
    %c0_i32_0 = arith.constant 0 : i32
    return %c0_i32, %arg1 : i32, i32
  }
  func.func @transform_4(%arg0: i32, %arg1: i32) -> i32 {
    %c0_i32 = arith.constant 0 : i32
    %c0_i32_0 = arith.constant 0 : i32
    return %c0_i32 : i32
  }
  func.func @transform_5(%arg0: i32, %arg1: i32) -> (i32, i32) {
    %c0_i32 = arith.constant 0 : i32
    %c0_i32_0 = arith.constant 0 : i32
    return %c0_i32, %arg0 : i32, i32
  }
}

</mosaic_0001>

<llo_original>
// kernel: tpu_custom_call.1
$region0: #{tpu_custom_call.1}
  #allocation0 [shape = 'u32[]', space=smem, size = 0x4, offset = 0x4, fixed_abs, tag = 'smem constant byte address 0x4 - core index']
  #allocation1 [shape = 'u32[144,128]{1,0:T(1,128)}', space=vmem, size = 0x12000, scoped, tag = 'internal scratch']
  #allocation2 [shape = 'f32[1,32]{1,0:T(1,128)}', space=vmem, size = 0x200, scoped, tag = 'scratch operand']
  #allocation3 [shape = 'f32[1]{0:T(128)S(6)}', space=smem, size = 0x200, scoped, tag = 'scoped memory for tpu_custom_call.1']
  %s0 = inlined_call_operand.hbm [shape: f32[32,128], index: 0, kind: input, shape index: {}]
  %s1 = inlined_call_operand.hbm [shape: f32[128,128], index: 1, kind: input, shape index: {}]
  %s2 = inlined_call_operand.vmem [shape: f32[1,128], index: 2, kind: input, shape index: {}]
  %s3 = inlined_call_operand.vmem [shape: f32[1,128], index: 3, kind: input, shape index: {}]
  %s4 = inlined_call_operand.<no memory space> [shape: f32[1], index: 4, kind: input, shape index: {}]
  %s5 = inlined_call_operand.hbm [shape: f32[1,32], index: 5, kind: output, shape index: {}]
  %s6 = sld [smem:[#allocation0]]
  $region46: #{tpu_custom_call.1} parent=0
    _
  %s8 = ssub.s32 1, %s6
  %s9 = scalar_select 0, %s8, %s6
  %10 = sst [smem:[#allocation3]] %s4
  $region1: #{tpu_custom_call.1} parent=0
    #allocation4 [shape = 'u8[16384]{0}', space=vmem, size = 0x4000, scoped, tag = 'input window, operand 0, single buffered']
    #allocation5 [shape = 's32[1]{0}', space=sflag, size = 0x4, scoped, tag = 'scoped memory for tpu_custom_call.1']
    #allocation6 [shape = 's32[1]{0}', space=sflag, size = 0x4, scoped, tag = 'scoped memory for tpu_custom_call.1']
    #allocation7 [shape = 'u8[65536]{0}', space=vmem, size = 0x10000, scoped, tag = 'input window, operand 1, single buffered']
    #allocation8 [shape = 's32[1]{0}', space=sflag, size = 0x4, scoped, tag = 'scoped memory for tpu_custom_call.1']
    #allocation9 [shape = 'u8[512]{0}', space=vmem, size = 0x400, scoped, tag = 'output window, operand 0, single buffered']
    %11 = vsyncpa [#allocation5], 0
    %12 = vsyncpa [#allocation8], 0
    %13 = vsyncpa [#allocation6], 0
    // Predicated region
    $region2: #{tpu_custom_call.1} parent=1 // pred_check
      _
    $region3: #{tpu_custom_call.1} parent=1 // pred_check_branch
      %15 = sbr.rel (0) target = $region5
    $region4: #{tpu_custom_call.1} parent=1 // pred_region
      %s17 = ssub.s32 512, 512
      %18 = vsyncadd [#allocation5], %s17
      %s19 = sshll.u32 [#allocation4], 4
      %s20 = int_to_ptr.vmem [resolvable:$true] %s19
      %25 = dma.hbm_to_vmem [thread:$0]  %s0, 512, %s20, [#allocation5], 128, 128, 8
    $region5: #{tpu_custom_call.1} parent=1 // pred_fallthru
      _
    // Predicated region
    $region6: #{tpu_custom_call.1} parent=1 // pred_check
      _
    $region7: #{tpu_custom_call.1} parent=1 // pred_check_branch
      %27 = sbr.rel (0) target = $region9
    $region8: #{tpu_custom_call.1} parent=1 // pred_region
      %s29 = ssub.s32 2048, 2048
      %30 = vsyncadd [#allocation8], %s29
      %s31 = sshll.u32 [#allocation7], 4
      %s32 = int_to_ptr.vmem [resolvable:$true] %s31
      %37 = dma.hbm_to_vmem [thread:$0]  %s1, 2048, %s32, [#allocation8], 128, 128, 8
    $region9: #{tpu_custom_call.1} parent=1 // pred_fallthru
      _
    // Predicated region
    $region10: #{tpu_custom_call.1} parent=1 // pred_check
      _
    $region11: #{tpu_custom_call.1} parent=1 // pred_check_branch
      %39 = sbr.rel (0) target = $region13
    $region12: #{tpu_custom_call.1} parent=1 // pred_region
      _
    $region13: #{tpu_custom_call.1} parent=1 // pred_fallthru
      _
    // Predicated region
    $region14: #{tpu_custom_call.1} parent=1 // pred_check
      _
    $region15: #{tpu_custom_call.1} parent=1 // pred_check_branch
      %41 = sbr.rel (0) target = $region17
    $region16: #{tpu_custom_call.1} parent=1 // pred_region
      _
    $region17: #{tpu_custom_call.1} parent=1 // pred_fallthru
      _
    // Predicated region
    $region18: #{tpu_custom_call.1} parent=1 // pred_check
      _
    $region19: #{tpu_custom_call.1} parent=1 // pred_check_branch
      %43 = sbr.rel (0) target = $region21
    $region20: #{tpu_custom_call.1} parent=1 // pred_region
      _
    $region21: #{tpu_custom_call.1} parent=1 // pred_fallthru
      _
    // Predicated region
    $region22: #{tpu_custom_call.1} parent=1 // pred_check
      _
    $region23: #{tpu_custom_call.1} parent=1 // pred_check_branch
      %45 = sbr.rel (0) target = $region25
    $region24: #{tpu_custom_call.1} parent=1 // pred_region
      %46 = dma.done [#allocation5], 512
    $region25: #{tpu_custom_call.1} parent=1 // pred_fallthru
      _
    // Predicated region
    $region26: #{tpu_custom_call.1} parent=1 // pred_check
      _
    $region27: #{tpu_custom_call.1} parent=1 // pred_check_branch
      %48 = sbr.rel (0) target = $region29
    $region28: #{tpu_custom_call.1} parent=1 // pred_region
      %49 = dma.done [#allocation8], 2048
    $region29: #{tpu_custom_call.1} parent=1 // pred_fallthru
      _
    %p50 = scmp.eq.s32.totalorder 0, 0
    // Predicated region
    $region30: #{tpu_custom_call.1} parent=1 // pred_check
      %p51 = pneg %p50
    $region31: #{tpu_custom_call.1} parent=1 // pred_check_branch
      %53 = sbr.rel (%p51) target = $region33
    $region32: #{tpu_custom_call.1} parent=1 // pred_region
      %vm54 = vcmask 253952
      %55 = vst.msk [vmem:[#allocation2] sm:$0x1] %vm54, 0.0
    $region33: #{tpu_custom_call.1} parent=1 // pred_fallthru
      _
    %v56 = vld [vmem:[#allocation4] sm:$0xff]
    %v57 = vld [vmem:[#allocation4 + $0x8] sm:$0xff]
    %v58 = vld [vmem:[#allocation4 + $0x10] sm:$0xff]
    %v59 = vld [vmem:[#allocation4 + $0x18] sm:$0xff]
    %v60 = vld [vmem:[#allocation7] sm:$0xff]
    %v61 = vld [vmem:[#allocation7 + $0x8] sm:$0xff]
    %v62 = vld [vmem:[#allocation7 + $0x10] sm:$0xff]
    %v63 = vld [vmem:[#allocation7 + $0x18] sm:$0xff]
    %v64 = vld [vmem:[#allocation7 + $0x20] sm:$0xff]
    %v65 = vld [vmem:[#allocation7 + $0x28] sm:$0xff]
    %v66 = vld [vmem:[#allocation7 + $0x30] sm:$0xff]
    %v67 = vld [vmem:[#allocation7 + $0x38] sm:$0xff]
    %v68 = vld [vmem:[#allocation7 + $0x40] sm:$0xff]
    %v69 = vld [vmem:[#allocation7 + $0x48] sm:$0xff]
    %v70 = vld [vmem:[#allocation7 + $0x50] sm:$0xff]
    %v71 = vld [vmem:[#allocation7 + $0x58] sm:$0xff]
    %v72 = vld [vmem:[#allocation7 + $0x60] sm:$0xff]
    %v73 = vld [vmem:[#allocation7 + $0x68] sm:$0xff]
    %v74 = vld [vmem:[#allocation7 + $0x70] sm:$0xff]
    %v75 = vld [vmem:[#allocation7 + $0x78] sm:$0xff]
    %v76 = vld [vmem:[%s2] sm:$0x1]
    %v78 = vlaneseq
    %v79 = vshrl.u32 %v78, 7
    %v80 = vsub.s32 0, %v79
    %v81 = vrot.slane %v76, %v80
    %83 = vmatprep.subr.mxu0 0.0
    %84 = vmatpush1.xpose.msra.mxu0 %v60
    %85 = vmatprep.subr.mxu0 0.0
    %86 = vmatpush1.xpose.msra.mxu0 %v61
    %87 = vmatprep.subr.mxu0 0.0
    %88 = vmatpush1.xpose.msra.mxu0 %v62
    %89 = vmatprep.subr.mxu0 0.0
    %90 = vmatpush1.xpose.msra.mxu0 %v63
    %91 = vmatprep.subr.mxu0 0.0
    %92 = vmatpush1.xpose.msra.mxu0 %v64
    %93 = vmatprep.subr.mxu0 0.0
    %94 = vmatpush1.xpose.msra.mxu0 %v65
    %95 = vmatprep.subr.mxu0 0.0
    %96 = vmatpush1.xpose.msra.mxu0 %v66
    %97 = vmatprep.subr.mxu0 0.0
    %98 = vmatpush1.xpose.msra.mxu0 %v67
    %99 = vmatprep.subr.mxu0 0.0
    %100 = vmatpush1.xpose.msra.mxu0 %v68
    %101 = vmatprep.subr.mxu0 0.0
    %102 = vmatpush1.xpose.msra.mxu0 %v69
    %103 = vmatprep.subr.mxu0 0.0
    %104 = vmatpush1.xpose.msra.mxu0 %v70
    %105 = vmatprep.subr.mxu0 0.0
    %106 = vmatpush1.xpose.msra.mxu0 %v71
    %107 = vmatprep.subr.mxu0 0.0
    %108 = vmatpush1.xpose.msra.mxu0 %v72
    %109 = vmatprep.subr.mxu0 0.0
    %110 = vmatpush1.xpose.msra.mxu0 %v73
    %111 = vmatprep.subr.mxu0 0.0
    %112 = vmatpush1.xpose.msra.mxu0 %v74
    %113 = vmatprep.subr.mxu0 0.0
    %114 = vmatpush1.xpose.msra.mxu0 %v75
    %115 = vmatprep.subr.mxu0 0.0
    %116 = vmatpush1.xpose.msra.mxu0 0.0
    %117 = vmatprep.subr.mxu0 0.0
    %118 = vmatpush1.xpose.msra.mxu0 0.0
    %119 = vmatprep.subr.mxu0 0.0
    %120 = vmatpush1.xpose.msra.mxu0 0.0
    %121 = vmatprep.subr.mxu0 0.0
    %122 = vmatpush1.xpose.msra.mxu0 0.0
    %123 = vmatprep.subr.mxu0 0.0
    %124 = vmatpush1.xpose.msra.mxu0 0.0
    %125 = vmatprep.subr.mxu0 0.0
    %126 = vmatpush1.xpose.msra.mxu0 0.0
    %127 = vmatprep.subr.mxu0 0.0
    %128 = vmatpush1.xpose.msra.mxu0 0.0
    %129 = vmatprep.subr.mxu0 0.0
    %130 = vmatpush1.xpose.msra.mxu0 0.0
    %131 = vmatprep.subr.mxu0 0.0
    %132 = vmatpush1.xpose.msra.mxu0 0.0
    %133 = vmatprep.subr.mxu0 0.0
    %134 = vmatpush1.xpose.msra.mxu0 0.0
    %135 = vmatprep.subr.mxu0 0.0
    %136 = vmatpush1.xpose.msra.mxu0 0.0
    %137 = vmatprep.subr.mxu0 0.0
    %138 = vmatpush1.xpose.msra.mxu0 0.0
    %139 = vmatprep.subr.mxu0 0.0
    %140 = vmatpush1.xpose.msra.mxu0 0.0
    %141 = vmatprep.subr.mxu0 0.0
    %142 = vmatpush1.xpose.msra.mxu0 0.0
    %143 = vmatprep.subr.mxu0 0.0
    %144 = vmatpush1.xpose.msra.mxu0 0.0
    %145 = vmatprep.subr.mxu0 0.0
    %146 = vmatpush1.xpose.msra.mxu0 0.0
    %147 = vmatprep.mubr.f32.mxu0 0.0
    %148 = vmatmul.mubr.f32.gmra.mrb[0].mxu0 %v56
    %v149 = vpop.f32.mrb[0].mxu0
    %v150 = vadd.f32 %v81, %v149
    %v151 = vpop.f32.mrb[0].mxu0
    %152 = vmatprep.mubr.f32.mxu0 0.0
    %153 = vmatmul.mubr.f32.gmra.mrb[0].mxu0 %v57
    %v154 = vpop.f32.mrb[0].mxu0
    %v155 = vadd.f32 %v81, %v154
    %v156 = vpop.f32.mrb[0].mxu0
    %157 = vmatprep.mubr.f32.mxu0 0.0
    %158 = vmatmul.mubr.f32.gmra.mrb[0].mxu0 %v58
    %v159 = vpop.f32.mrb[0].mxu0
    %v160 = vadd.f32 %v81, %v159
    %v161 = vpop.f32.mrb[0].mxu0
    %162 = vmatprep.mubr.f32.mxu0 0.0
    %163 = vmatmul.mubr.f32.gmra.mrb[0].mxu0 %v59
    %v164 = vpop.f32.mrb[0].mxu0
    %v165 = vadd.f32 %v81, %v164
    %v166 = vpop.f32.mrb[0].mxu0
    %167 = vdwg.mxu0
    %v168 = vmax.f32 %v150, 0.0
    %v169 = vmax.f32 %v155, 0.0
    %v170 = vmax.f32 %v160, 0.0
    %v171 = vmax.f32 %v165, 0.0
    %v172 = vld [vmem:[#allocation2] sm:$0x1]
    %v173 = vld [vmem:[%s3] sm:$0x1]
    %174 = vmatprep.subr.mxu0 0.0
    %175 = vmatpush1.xpose.msra.mxu0 %v168
    %176 = vmatprep.subr.mxu0 0.0
    %177 = vmatpush1.xpose.msra.mxu0 %v169
    %178 = vmatprep.subr.mxu0 0.0
    %179 = vmatpush1.xpose.msra.mxu0 %v170
    %180 = vmatprep.subr.mxu0 0.0
    %181 = vmatpush1.xpose.msra.mxu0 %v171
    %182 = vmatprep.subr.mxu0 0.0
    %183 = vmatpush1.xpose.msra.mxu0 0.0
    %184 = vmatprep.subr.mxu0 0.0
    %185 = vmatpush1.xpose.msra.mxu0 0.0
    %186 = vmatprep.subr.mxu0 0.0
    %187 = vmatpush1.xpose.msra.mxu0 0.0
    %188 = vmatprep.subr.mxu0 0.0
    %189 = vmatpush1.xpose.msra.mxu0 0.0
    %190 = vmatprep.subr.mxu0 0.0
    %191 = vmatpush1.xpose.msra.mxu0 0.0
    %192 = vmatprep.subr.mxu0 0.0
    %193 = vmatpush1.xpose.msra.mxu0 0.0
    %194 = vmatprep.subr.mxu0 0.0
    %195 = vmatpush1.xpose.msra.mxu0 0.0
    %196 = vmatprep.subr.mxu0 0.0
    %197 = vmatpush1.xpose.msra.mxu0 0.0
    %198 = vmatprep.subr.mxu0 0.0
    %199 = vmatpush1.xpose.msra.mxu0 0.0
    %200 = vmatprep.subr.mxu0 0.0
    %201 = vmatpush1.xpose.msra.mxu0 0.0
    %202 = vmatprep.subr.mxu0 0.0
    %203 = vmatpush1.xpose.msra.mxu0 0.0
    %204 = vmatprep.subr.mxu0 0.0
    %205 = vmatpush1.xpose.msra.mxu0 0.0
    %206 = vmatprep.subr.mxu0 0.0
    %207 = vmatpush1.xpose.msra.mxu0 0.0
    %208 = vmatprep.subr.mxu0 0.0
    %209 = vmatpush1.xpose.msra.mxu0 0.0
    %210 = vmatprep.subr.mxu0 0.0
    %211 = vmatpush1.xpose.msra.mxu0 0.0
    %212 = vmatprep.subr.mxu0 0.0
    %213 = vmatpush1.xpose.msra.mxu0 0.0
    %214 = vmatprep.subr.mxu0 0.0
    %215 = vmatpush1.xpose.msra.mxu0 0.0
    %216 = vmatprep.subr.mxu0 0.0
    %217 = vmatpush1.xpose.msra.mxu0 0.0
    %218 = vmatprep.subr.mxu0 0.0
    %219 = vmatpush1.xpose.msra.mxu0 0.0
    %220 = vmatprep.subr.mxu0 0.0
    %221 = vmatpush1.xpose.msra.mxu0 0.0
    %222 = vmatprep.subr.mxu0 0.0
    %223 = vmatpush1.xpose.msra.mxu0 0.0
    %224 = vmatprep.subr.mxu0 0.0
    %225 = vmatpush1.xpose.msra.mxu0 0.0
    %226 = vmatprep.subr.mxu0 0.0
    %227 = vmatpush1.xpose.msra.mxu0 0.0
    %228 = vmatprep.subr.mxu0 0.0
    %229 = vmatpush1.xpose.msra.mxu0 0.0
    %230 = vmatprep.subr.mxu0 0.0
    %231 = vmatpush1.xpose.msra.mxu0 0.0
    %232 = vmatprep.subr.mxu0 0.0
    %233 = vmatpush1.xpose.msra.mxu0 0.0
    %234 = vmatprep.subr.mxu0 0.0
    %235 = vmatpush1.xpose.msra.mxu0 0.0
    %236 = vmatprep.subr.mxu0 0.0
    %237 = vmatpush1.xpose.msra.mxu0 0.0
    %238 = vmatprep.mubr.f32.mxu0 0.0
    %239 = vmatmul.mubr.f32.gmra.mrb[0].mxu0 %v173
    %v240 = vpop.f32.mrb[0].mxu0
    %v241 = vadd.f32 0.0, %v240
    %v242 = vpop.f32.mrb[0].mxu0
    %243 = vdwg.mxu0
    %v244 = vadd.f32 %v172, %v241
    %vm245 = vcmask 253952
    %246 = vst.msk [vmem:[#allocation2] sm:$0x1] %vm245, %v244
    // Predicated region
    $region34: #{tpu_custom_call.1} parent=1 // pred_check
      %p247 = pneg %p50
    $region35: #{tpu_custom_call.1} parent=1 // pred_check_branch
      %249 = sbr.rel (%p247) target = $region37
    $region36: #{tpu_custom_call.1} parent=1 // pred_region
      %v250 = vld [vmem:[#allocation2] sm:$0x1]
      %s251 = sld [smem:[#allocation3]]
      %v252 = vstv %s251
      %v253 = vadd.f32 %v250, %v252
      %254 = vst.msk [vmem:[#allocation9] sm:$0x1] %vm245, %v253
    $region37: #{tpu_custom_call.1} parent=1 // pred_fallthru
      _
    // Predicated region
    $region38: #{tpu_custom_call.1} parent=1 // pred_check
      _
    $region39: #{tpu_custom_call.1} parent=1 // pred_check_branch
      %256 = sbr.rel (0) target = $region41
    $region40: #{tpu_custom_call.1} parent=1 // pred_region
      %s258 = ssub.s32 16, 16
      %259 = vsyncadd [#allocation6], %s258
      %s261 = sshll.u32 [#allocation9], 4
      %s262 = int_to_ptr.vmem [resolvable:$true] %s261
      %264 = dma.vmem_to_hbm [thread:$0]  %s262, 16, %s5, [#allocation6]
    $region41: #{tpu_custom_call.1} parent=1 // pred_fallthru
      _
    // Predicated region
    $region42: #{tpu_custom_call.1} parent=1 // pred_check
      _
    $region43: #{tpu_custom_call.1} parent=1 // pred_check_branch
      %266 = sbr.rel (0) target = $region45
    $region44: #{tpu_custom_call.1} parent=1 // pred_region
      %267 = dma.done [#allocation6], 16
    $region45: #{tpu_custom_call.1} parent=1 // pred_fallthru
      _
    %268 = vsyncpa [#allocation5], 1
    %269 = vsyncpa [#allocation8], 1
    %270 = vsyncpa [#allocation6], 1

</llo_original>
